<compile_context>
chip_gen: v7x
topology: tpu7x:2x2x1
jax: 0.10.0
libtpu: 0.0.40
codegen_flags: <defaults>
</compile_context>

<pallas_src>
from dataclasses import dataclass
from typing import List, Tuple

import numpy as np
import jax
import jax.numpy as jnp
from jax import lax
from jax.experimental import pallas as pl
from jax.experimental.pallas import tpu as pltpu


def word_encoder_kernel(x_ref, w_ref, starts_ref, ends_ref, out_ref):
    x = x_ref[...]                                   # (S, D) bf16, resident across grid
    w = w_ref[...]                                   # (D, 1) bf16, resident across grid
    S = x.shape[0]
    TW = out_ref.shape[0]

    # Per-subtoken attention logit: (S, D) @ (D, 1), f32 accumulation on the MXU.
    # Linear bias omitted: softmax is shift-invariant, so it cannot change the output.
    scores = jnp.dot(x, w, preferred_element_type=jnp.float32)   # (S, 1) f32
    scores_row = scores.reshape(1, S)                            # (1, S) one-time relayout

    # Masked-exp softmax: one exp per subtoken, shared by every word row in the tile.
    g = jnp.max(scores_row, axis=1, keepdims=True)               # (1, 1) global max
    e_row = jnp.exp(scores_row - g)                              # (1, S) f32 (EUP)

    # Word-span mask: subtoken index lies in [start, end) for each word of this tile.
    idx = lax.broadcasted_iota(jnp.int32, (TW, S), dimension=1)
    mask = (idx >= starts_ref[...]) & (idx < ends_ref[...])      # (TW, S) bool

    # Unnormalized attention; the (1, S) row broadcasts implicitly (single VPU select).
    attn_un = jnp.where(mask, e_row, 0.0)                        # (TW, S) f32
    denom = jnp.sum(attn_un, axis=1, keepdims=True)              # (TW, 1) f32 (XLU, hidden under MXU)

    # words = attn @ x on the MXU in bf16, normalized after the matmul.
    numer = jnp.dot(attn_un.astype(jnp.bfloat16), x,
                    preferred_element_type=jnp.float32)          # (TW, D) f32
    out_ref[...] = numer * pl.reciprocal(denom, approx=True)


def word_encoder_forward(x, attn_weight, attn_bias, starts, ends, *, word_tile=128):
    """x: (S, D) float, attn_weight: (D,), attn_bias: (1,), starts/ends: (n_words,) int.

    Returns (n_words, D) float32 word representations (dropout = identity, eval mode).
    """
    del attn_bias  # softmax shift-invariance: the Linear bias cannot change the output
    S, D = x.shape
    n_words = starts.shape[0]

    # Word tile: multiple of 8, at most `word_tile`, no larger than the padded word count
    # (small docs -> one grid step, big docs -> 128-row MXU-friendly tiles).
    n_words_pad8 = pl.cdiv(n_words, 8) * 8
    tw = min(max(8, (int(word_tile) // 8) * 8), n_words_pad8)
    n_pad = pl.cdiv(n_words, tw) * tw

    x_bf = x.astype(jnp.bfloat16)
    w_col = attn_weight.reshape(D, 1).astype(jnp.bfloat16)
    # Pad the word axis to a multiple of the tile. Padded rows get the valid span [0, 1)
    # so they stay finite; they are sliced away below.
    starts2 = jnp.zeros((n_pad, 1), jnp.int32).at[:n_words, 0].set(starts.astype(jnp.int32))
    ends2 = jnp.ones((n_pad, 1), jnp.int32).at[:n_words, 0].set(ends.astype(jnp.int32))

    out = pl.pallas_call(
        word_encoder_kernel,
        out_shape=jax.ShapeDtypeStruct((n_pad, D), jnp.float32),
        grid=(n_pad // tw,),
        in_specs=[
            pl.BlockSpec((S, D), lambda i: (0, 0)),    # x: resident across word tiles
            pl.BlockSpec((D, 1), lambda i: (0, 0)),    # attn weight column: resident
            pl.BlockSpec((tw, 1), lambda i: (i, 0)),   # starts tile
            pl.BlockSpec((tw, 1), lambda i: (i, 0)),   # ends tile
        ],
        out_specs=pl.BlockSpec((tw, D), lambda i: (i, 0)),
        compiler_params=pltpu.CompilerParams(
            dimension_semantics=("parallel",),
            vmem_limit_bytes=64 * 1024 * 1024,
        ),
    )(x_bf, w_col, starts2, ends2)
    return out[:n_words]


@dataclass
class Doc:
    word2subword: List[Tuple[int, int]]
    word_clusters: List[List[int]]
    cased_words: List[str]


def cluster_ids(doc: Doc) -> jnp.ndarray:
    # Host-side glue: dict lookup over python lists (no tensor compute).
    word2cluster = {w: i for i, cluster in enumerate(doc.word_clusters, start=1)
                    for w in cluster}
    return jnp.asarray([word2cluster.get(i, 0) for i in range(len(doc.cased_words))],
                       dtype=jnp.int32)


def reference_forward(x, attn_weight, attn_bias, starts, ends):
    """Pure-JAX f32 reference mirroring the PyTorch code (including the bias)."""
    S, D = x.shape
    n_words = starts.shape[0]
    scores = (x @ attn_weight.reshape(D, 1) + attn_bias).T                  # (1, S)
    idx = jnp.arange(S)[None, :]
    mask = (idx >= starts[:, None]) & (idx < ends[:, None])
    logits = jnp.log(mask.astype(jnp.float32)) + jnp.broadcast_to(scores, (n_words, S))
    attn = jax.nn.softmax(logits, axis=1)
    return attn @ x


if __name__ == "__main__":
    key = jax.random.PRNGKey(0)
    k_x, k_w, k_b = jax.random.split(key, 3)

    # Small but layout-friendly shapes: S mult of 8, D mult of 128, n_words mult of 8.
    S, D, n_words = 64, 128, 16   # n_subtokens, bert_dim, n_words

    x = jax.random.normal(k_x, (S, D), dtype=jnp.float32)
    attn_weight = jax.random.normal(k_w, (D,), dtype=jnp.float32) * 0.1
    attn_bias = jax.random.normal(k_b, (1,), dtype=jnp.float32) * 0.1

    # Synthetic document: 16 words, each spanning 4 contiguous subtokens.
    word2subword = [(4 * i, 4 * i + 4) for i in range(n_words)]
    doc = Doc(
        word2subword=word2subword,
        word_clusters=[[0, 3], [2, 5, 7], [9, 12, 14]],
        cased_words=[f"w{i}" for i in range(n_words)],
    )

    starts = jnp.asarray([s for s, _ in doc.word2subword], dtype=jnp.int32)
    ends = jnp.asarray([e for _, e in doc.word2subword], dtype=jnp.int32)

    words = word_encoder_forward(x, attn_weight, attn_bias, starts, ends)
    words = jax.block_until_ready(words)
    cids = cluster_ids(doc)
    cids = jax.block_until_ready(cids)

    # Verify against a pure-JAX f32 reference of the PyTorch forward.
    # Tolerance is loosened because the MXU matmuls run in bf16 (f32 accumulation).
    ref = reference_forward(x, attn_weight, attn_bias, starts, ends)
    np.testing.assert_allclose(np.asarray(words), np.asarray(ref), rtol=3e-2, atol=3e-2)
    assert words.shape == (n_words, D)
    assert cids.shape == (n_words,)

    print("KERNEL_OK")
</pallas_src>

<mosaic_0001>
module attributes {stable_mosaic.version = 11 : i64} {
  func.func @word_encoder_kernel(%arg0: i32, %arg1: memref<64x128xbf16, #tpu.memory_space<vmem>>, %arg2: memref<128x1xbf16, #tpu.memory_space<vmem>>, %arg3: memref<16x1xi32, #tpu.memory_space<vmem>>, %arg4: memref<16x1xi32, #tpu.memory_space<vmem>>, %arg5: memref<16x128xf32, #tpu.memory_space<vmem>>) attributes {dimension_semantics = [#tpu.dimension_semantics<parallel>], iteration_bounds = array<i64: 1>, scalar_prefetch = 0 : i64, scratch_operands = 0 : i64, tpu.core_type = #tpu.core_type<tc>, window_params = [{pipeline_mode = #tpu.pipeline_mode<synchronous>, transform_indices = @transform_0, window_bounds = array<i64: 64, 128>}, {pipeline_mode = #tpu.pipeline_mode<synchronous>, transform_indices = @transform_1, window_bounds = array<i64: 128, 1>}, {transform_indices = @transform_2, window_bounds = array<i64: 16, 1>}, {transform_indices = @transform_3, window_bounds = array<i64: 16, 1>}, {transform_indices = @transform_4, window_bounds = array<i64: 16, 128>}]} {
    %c0 = arith.constant 0 : index
    %c0_0 = arith.constant 0 : index
    %0 = vector.load %arg1[%c0, %c0_0] : memref<64x128xbf16, #tpu.memory_space<vmem>>, vector<64x128xbf16>
    %c0_1 = arith.constant 0 : index
    %c0_2 = arith.constant 0 : index
    %1 = vector.load %arg2[%c0_1, %c0_2] : memref<128x1xbf16, #tpu.memory_space<vmem>>, vector<128x1xbf16>
    %cst = arith.constant dense<0.000000e+00> : vector<64x1xf32>
    %2 = tpu.matmul %0, %1, %cst {dimension_numbers = #tpu.dot_dimension_numbers<[1], [0], [0], [1], [0, 0, 1, 1], [], []>} : vector<64x128xbf16>, vector<128x1xbf16>, vector<64x1xf32> -> vector<64x1xf32>
    %3 = vector.shape_cast %2 : vector<64x1xf32> to vector<1x64xf32>
    %cst_3 = arith.constant dense<0xFF800000> : vector<1xf32>
    %4 = vector.multi_reduction <maximumf>, %3, %cst_3 [1] : vector<1x64xf32> to vector<1xf32>
    %5 = vector.shape_cast %4 : vector<1xf32> to vector<1x1xf32>
    %6 = vector.broadcast %5 : vector<1x1xf32> to vector<1x64xf32>
    %7 = arith.subf %3, %6 : vector<1x64xf32>
    %8 = math.exp %7 : vector<1x64xf32>
    %9 = tpu.iota {dimensions = array<i32: 1>} : vector<16x64xi32>
    %c0_4 = arith.constant 0 : index
    %c0_5 = arith.constant 0 : index
    %10 = vector.load %arg3[%c0_4, %c0_5] : memref<16x1xi32, #tpu.memory_space<vmem>>, vector<16x1xi32>
    %11 = vector.broadcast %10 : vector<16x1xi32> to vector<16x64xi32>
    %12 = arith.cmpi sge, %9, %11 : vector<16x64xi32>
    %c0_6 = arith.constant 0 : index
    %c0_7 = arith.constant 0 : index
    %13 = vector.load %arg4[%c0_6, %c0_7] : memref<16x1xi32, #tpu.memory_space<vmem>>, vector<16x1xi32>
    %14 = vector.broadcast %13 : vector<16x1xi32> to vector<16x64xi32>
    %15 = arith.cmpi slt, %9, %14 : vector<16x64xi32>
    %16 = arith.andi %12, %15 : vector<16x64xi1>
    %cst_8 = arith.constant 0.000000e+00 : f32
    %17 = vector.shape_cast %8 : vector<1x64xf32> to vector<1x64xf32>
    %18 = vector.broadcast %17 : vector<1x64xf32> to vector<16x64xf32>
    %19 = vector.broadcast %cst_8 : f32 to vector<16x64xf32>
    %20 = arith.select %16, %18, %19 : vector<16x64xi1>, vector<16x64xf32>
    %cst_9 = arith.constant dense<0.000000e+00> : vector<16xf32>
    %21 = vector.multi_reduction <add>, %20, %cst_9 [1] : vector<16x64xf32> to vector<16xf32>
    %22 = vector.shape_cast %21 : vector<16xf32> to vector<16x1xf32>
    %23 = arith.truncf %20 : vector<16x64xf32> to vector<16x64xbf16>
    %cst_10 = arith.constant dense<0.000000e+00> : vector<16x128xf32>
    %24 = tpu.matmul %23, %0, %cst_10 {dimension_numbers = #tpu.dot_dimension_numbers<[1], [0], [0], [1], [0, 0, 1, 1], [], []>} : vector<16x64xbf16>, vector<64x128xbf16>, vector<16x128xf32> -> vector<16x128xf32>
    %25 = tpu.reciprocal %22 {approx = true} : vector<16x1xf32> -> vector<16x1xf32>
    %26 = vector.broadcast %25 : vector<16x1xf32> to vector<16x128xf32>
    %27 = arith.mulf %24, %26 : vector<16x128xf32>
    %c0_11 = arith.constant 0 : index
    %c0_12 = arith.constant 0 : index
    %28 = vector.load %arg5[%c0_11, %c0_12] : memref<16x128xf32, #tpu.memory_space<vmem>>, vector<16x128xf32>
    tpu.vector_store %arg5[%c0_11, %c0_12], %27 {strides = array<i32>} : memref<16x128xf32, #tpu.memory_space<vmem>>, vector<16x128xf32>,
    return
  }
  func.func @transform_0(%arg0: i32) -> (i32, i32) {
    %c0_i32 = arith.constant 0 : i32
    %c0_i32_0 = arith.constant 0 : i32
    %c0_i32_1 = arith.constant 0 : i32
    return %c0_i32, %c0_i32_0 : i32, i32
  }
  func.func @transform_1(%arg0: i32) -> (i32, i32) {
    %c0_i32 = arith.constant 0 : i32
    %c0_i32_0 = arith.constant 0 : i32
    %c0_i32_1 = arith.constant 0 : i32
    return %c0_i32, %c0_i32_0 : i32, i32
  }
  func.func @transform_2(%arg0: i32) -> (i32, i32) {
    %c0_i32 = arith.constant 0 : i32
    %c0_i32_0 = arith.constant 0 : i32
    return %arg0, %c0_i32 : i32, i32
  }
  func.func @transform_3(%arg0: i32) -> (i32, i32) {
    %c0_i32 = arith.constant 0 : i32
    %c0_i32_0 = arith.constant 0 : i32
    return %arg0, %c0_i32 : i32, i32
  }
  func.func @transform_4(%arg0: i32) -> (i32, i32) {
    %c0_i32 = arith.constant 0 : i32
    %c0_i32_0 = arith.constant 0 : i32
    return %arg0, %c0_i32 : i32, i32
  }
}

</mosaic_0001>

<llo_original>
// kernel: tpu_custom_call.1
$region0: #{tpu_custom_call.1}
  #allocation0 [shape = 'u32[]', space=smem, size = 0x4, offset = 0x4, fixed_abs, tag = 'smem constant byte address 0x4 - core index']
  #allocation1 [shape = 'u32[144,128]{1,0:T(1,128)}', space=vmem, size = 0x12000, scoped, tag = 'internal scratch']
  %s0 = inlined_call_operand.hbm [shape: bf16[64,128], index: 0, kind: input, shape index: {}]
  %s1 = inlined_call_operand.hbm [shape: bf16[128,1], index: 1, kind: input, shape index: {}]
  %s2 = inlined_call_operand.hbm [shape: s32[16,1], index: 2, kind: input, shape index: {}]
  %s3 = inlined_call_operand.hbm [shape: s32[16,1], index: 3, kind: input, shape index: {}]
  %s4 = inlined_call_operand.hbm [shape: f32[16,128], index: 4, kind: output, shape index: {}]
  %s5 = sld [smem:[#allocation0]]
  $region42: #{tpu_custom_call.1} parent=0
    _
  %s7 = ssub.s32 1, %s5
  %s8 = scalar_select 0, %s7, %s5
  $region1: #{tpu_custom_call.1} parent=0
    #allocation2 [shape = 'u8[16384]{0}', space=vmem, size = 0x4000, scoped, tag = 'input window, operand 0, single buffered']
    #allocation3 [shape = 's32[1]{0}', space=sflag, size = 0x4, scoped, tag = 'scoped memory for tpu_custom_call.1']
    #allocation4 [shape = 's32[1]{0}', space=sflag, size = 0x4, scoped, tag = 'scoped memory for tpu_custom_call.1']
    #allocation5 [shape = 'u8[32768]{0}', space=vmem, size = 0x8000, scoped, tag = 'input window, operand 1, single buffered']
    #allocation6 [shape = 's32[1]{0}', space=sflag, size = 0x4, scoped, tag = 'scoped memory for tpu_custom_call.1']
    #allocation7 [shape = 'u8[8192]{0}', space=vmem, size = 0x2000, scoped, tag = 'input window, operand 2, single buffered']
    #allocation8 [shape = 'u8[8192]{0}', space=vmem, size = 0x2000, scoped, tag = 'input window, operand 3, single buffered']
    #allocation9 [shape = 's32[1]{0}', space=sflag, size = 0x4, scoped, tag = 'scoped memory for tpu_custom_call.1']
    #allocation10 [shape = 'u8[8192]{0}', space=vmem, size = 0x2000, scoped, tag = 'output window, operand 0, single buffered']
    %9 = vsyncpa [#allocation3], 0
    %10 = vsyncpa [#allocation6], 0
    %11 = vsyncpa [#allocation9], 0
    %12 = vsyncpa [#allocation4], 0
    // Predicated region
    $region2: #{tpu_custom_call.1} parent=1 // pred_check
      _
    $region3: #{tpu_custom_call.1} parent=1 // pred_check_branch
      %14 = sbr.rel (0) target = $region5
    $region4: #{tpu_custom_call.1} parent=1 // pred_region
      %s16 = ssub.s32 512, 512
      %17 = vsyncadd [#allocation3], %s16
      %s18 = sshll.u32 [#allocation2], 4
      %s19 = int_to_ptr.vmem [resolvable:$true] %s18
      %24 = dma.hbm_to_vmem [thread:$0]  %s0, 512, %s19, [#allocation3], 64, 64, 4
    $region5: #{tpu_custom_call.1} parent=1 // pred_fallthru
      _
    // Predicated region
    $region6: #{tpu_custom_call.1} parent=1 // pred_check
      _
    $region7: #{tpu_custom_call.1} parent=1 // pred_check_branch
      %26 = sbr.rel (0) target = $region9
    $region8: #{tpu_custom_call.1} parent=1 // pred_region
      %s28 = ssub.s32 1024, 1024
      %29 = vsyncadd [#allocation6], %s28
      %s30 = sshll.u32 [#allocation5], 4
      %s31 = int_to_ptr.vmem [resolvable:$true] %s30
      %36 = dma.hbm_to_vmem [thread:$0]  %s1, 1024, %s31, [#allocation6], 64, 64, 4
    $region9: #{tpu_custom_call.1} parent=1 // pred_fallthru
      _
    // Predicated region
    $region10: #{tpu_custom_call.1} parent=1 // pred_check
      _
    $region11: #{tpu_custom_call.1} parent=1 // pred_check_branch
      %38 = sbr.rel (0) target = $region13
    $region12: #{tpu_custom_call.1} parent=1 // pred_region
      %s40 = ssub.s32 256, 256
      %41 = vsyncadd [#allocation6], %s40
      %s42 = sshll.u32 [#allocation7], 4
      %s43 = int_to_ptr.vmem [resolvable:$true] %s42
      %48 = dma.hbm_to_vmem [thread:$0]  %s2, 256, %s43, [#allocation6], 128, 128, 8
    $region13: #{tpu_custom_call.1} parent=1 // pred_fallthru
      _
    // Predicated region
    $region14: #{tpu_custom_call.1} parent=1 // pred_check
      _
    $region15: #{tpu_custom_call.1} parent=1 // pred_check_branch
      %50 = sbr.rel (0) target = $region17
    $region16: #{tpu_custom_call.1} parent=1 // pred_region
      %s52 = ssub.s32 256, 256
      %53 = vsyncadd [#allocation9], %s52
      %s54 = sshll.u32 [#allocation8], 4
      %s55 = int_to_ptr.vmem [resolvable:$true] %s54
      %60 = dma.hbm_to_vmem [thread:$0]  %s3, 256, %s55, [#allocation9], 128, 128, 8
    $region17: #{tpu_custom_call.1} parent=1 // pred_fallthru
      _
    // Predicated region
    $region18: #{tpu_custom_call.1} parent=1 // pred_check
      _
    $region19: #{tpu_custom_call.1} parent=1 // pred_check_branch
      %62 = sbr.rel (0) target = $region21
    $region20: #{tpu_custom_call.1} parent=1 // pred_region
      %63 = dma.done [#allocation3], 512
    $region21: #{tpu_custom_call.1} parent=1 // pred_fallthru
      _
    // Predicated region
    $region22: #{tpu_custom_call.1} parent=1 // pred_check
      _
    $region23: #{tpu_custom_call.1} parent=1 // pred_check_branch
      %65 = sbr.rel (0) target = $region25
    $region24: #{tpu_custom_call.1} parent=1 // pred_region
      %66 = dma.done [#allocation6], 1024
    $region25: #{tpu_custom_call.1} parent=1 // pred_fallthru
      _
    // Predicated region
    $region26: #{tpu_custom_call.1} parent=1 // pred_check
      _
    $region27: #{tpu_custom_call.1} parent=1 // pred_check_branch
      %68 = sbr.rel (0) target = $region29
    $region28: #{tpu_custom_call.1} parent=1 // pred_region
      %69 = dma.done [#allocation6], 256
    $region29: #{tpu_custom_call.1} parent=1 // pred_fallthru
      _
    // Predicated region
    $region30: #{tpu_custom_call.1} parent=1 // pred_check
      _
    $region31: #{tpu_custom_call.1} parent=1 // pred_check_branch
      %71 = sbr.rel (0) target = $region33
    $region32: #{tpu_custom_call.1} parent=1 // pred_region
      %72 = dma.done [#allocation9], 256
    $region33: #{tpu_custom_call.1} parent=1 // pred_fallthru
      _
    %v74 = vld [vmem:[#allocation2] sm:$0xf]
    %v75 = vld [vmem:[#allocation2 + $0x4] sm:$0xf]
    %v76 = vld [vmem:[#allocation2 + $0x8] sm:$0xf]
    %v77 = vld [vmem:[#allocation2 + $0xc] sm:$0xf]
    %v78 = vld [vmem:[#allocation2 + $0x10] sm:$0xf]
    %v79 = vld [vmem:[#allocation2 + $0x14] sm:$0xf]
    %v80 = vld [vmem:[#allocation2 + $0x18] sm:$0xf]
    %v81 = vld [vmem:[#allocation2 + $0x1c] sm:$0xf]
    %v82 = vld [vmem:[#allocation5] sm:$0xf]
    %v83 = vld [vmem:[#allocation5 + $0x4] sm:$0xf]
    %v84 = vld [vmem:[#allocation5 + $0x8] sm:$0xf]
    %v85 = vld [vmem:[#allocation5 + $0xc] sm:$0xf]
    %v86 = vld [vmem:[#allocation5 + $0x10] sm:$0xf]
    %v87 = vld [vmem:[#allocation5 + $0x14] sm:$0xf]
    %v88 = vld [vmem:[#allocation5 + $0x18] sm:$0xf]
    %v89 = vld [vmem:[#allocation5 + $0x1c] sm:$0xf]
    %v90 = vld [vmem:[#allocation5 + $0x20] sm:$0xf]
    %v91 = vld [vmem:[#allocation5 + $0x24] sm:$0xf]
    %v92 = vld [vmem:[#allocation5 + $0x28] sm:$0xf]
    %v93 = vld [vmem:[#allocation5 + $0x2c] sm:$0xf]
    %v94 = vld [vmem:[#allocation5 + $0x30] sm:$0xf]
    %v95 = vld [vmem:[#allocation5 + $0x34] sm:$0xf]
    %v96 = vld [vmem:[#allocation5 + $0x38] sm:$0xf]
    %v97 = vld [vmem:[#allocation5 + $0x3c] sm:$0xf]
    %v106 = vunpack.c.l.b16 %v74
    %v107 = vunpack.c.l.b16 %v75
    %v108 = vunpack.c.l.b16 %v76
    %v109 = vunpack.c.l.b16 %v77
    %v110 = vunpack.c.l.b16 %v78
    %v111 = vunpack.c.l.b16 %v79
    %v112 = vunpack.c.l.b16 %v80
    %v113 = vunpack.c.l.b16 %v81
    %v114 = vpack.c.b16 %v107, %v106
    %v115 = vpack.c.b16 %v109, %v108
    %v116 = vpack.c.b16 %v111, %v110
    %v117 = vpack.c.b16 %v113, %v112
    %v138 = vunpack.c.l.b16 %v82
    %v139 = vunpack.c.l.b16 %v83
    %v140 = vunpack.c.l.b16 %v84
    %v141 = vunpack.c.l.b16 %v85
    %v142 = vunpack.c.l.b16 %v86
    %v143 = vunpack.c.l.b16 %v87
    %v144 = vunpack.c.l.b16 %v88
    %v145 = vunpack.c.l.b16 %v89
    %v146 = vunpack.c.l.b16 %v90
    %v147 = vunpack.c.l.b16 %v91
    %v148 = vunpack.c.l.b16 %v92
    %v149 = vunpack.c.l.b16 %v93
    %v150 = vunpack.c.l.b16 %v94
    %v151 = vunpack.c.l.b16 %v95
    %v152 = vunpack.c.l.b16 %v96
    %v153 = vunpack.c.l.b16 %v97
    %v154 = vpack.c.b16 %v139, %v138
    %v155 = vpack.c.b16 %v141, %v140
    %v156 = vpack.c.b16 %v143, %v142
    %v157 = vpack.c.b16 %v145, %v144
    %v158 = vpack.c.b16 %v147, %v146
    %v159 = vpack.c.b16 %v149, %v148
    %v160 = vpack.c.b16 %v151, %v150
    %v161 = vpack.c.b16 %v153, %v152
    %170 = vmatprep.subr.bf16.mxu0 0
    %171 = vmatpush1.bf16.msra.mxu0 %v154
    %172 = vmatprep.subr.bf16.mxu0 0
    %173 = vmatpush1.bf16.msra.mxu0 %v155
    %174 = vmatprep.subr.bf16.mxu0 0
    %175 = vmatpush1.bf16.msra.mxu0 %v156
    %176 = vmatprep.subr.bf16.mxu0 0
    %177 = vmatpush1.bf16.msra.mxu0 %v157
    %178 = vmatprep.subr.bf16.mxu0 0
    %179 = vmatpush1.bf16.msra.mxu0 %v158
    %180 = vmatprep.subr.bf16.mxu0 0
    %181 = vmatpush1.bf16.msra.mxu0 %v159
    %182 = vmatprep.subr.bf16.mxu0 0
    %183 = vmatpush1.bf16.msra.mxu0 %v160
    %184 = vmatprep.subr.bf16.mxu0 0
    %185 = vmatpush1.bf16.msra.mxu0 %v161
    %186 = vmatprep.subr.bf16.mxu0 0
    %187 = vmatpush1.bf16.msra.mxu0 0
    %188 = vmatprep.subr.bf16.mxu0 0
    %189 = vmatpush1.bf16.msra.mxu0 0
    %190 = vmatprep.subr.bf16.mxu0 0
    %191 = vmatpush1.bf16.msra.mxu0 0
    %192 = vmatprep.subr.bf16.mxu0 0
    %193 = vmatpush1.bf16.msra.mxu0 0
    %194 = vmatprep.subr.bf16.mxu0 0
    %195 = vmatpush1.bf16.msra.mxu0 0
    %196 = vmatprep.subr.bf16.mxu0 0
    %197 = vmatpush1.bf16.msra.mxu0 0
    %198 = vmatprep.subr.bf16.mxu0 0
    %199 = vmatpush1.bf16.msra.mxu0 0
    %200 = vmatprep.subr.bf16.mxu0 0
    %201 = vmatpush1.bf16.msra.mxu0 0
    %202 = vmatprep.mubr.bf16.mxu0 0
    %203 = vmatmul.mubr.bf16.gmra.mrb[0].mxu0 %v114
    %v204 = vpop.f32.mrb[0].mxu0
    %v205 = vadd.f32 0.0, %v204
    %v206 = vpop.f32.mrb[0].mxu0
    %v207 = vpop.f32.mrb[0].mxu0
    %v208 = vadd.f32 0.0, %v207
    %v209 = vpop.f32.mrb[0].mxu0
    %210 = vmatprep.mubr.bf16.mxu0 0
    %211 = vmatmul.mubr.bf16.gmra.mrb[0].mxu0 %v115
    %v212 = vpop.f32.mrb[0].mxu0
    %v213 = vadd.f32 0.0, %v212
    %v214 = vpop.f32.mrb[0].mxu0
    %v215 = vpop.f32.mrb[0].mxu0
    %v216 = vadd.f32 0.0, %v215
    %v217 = vpop.f32.mrb[0].mxu0
    %218 = vmatprep.mubr.bf16.mxu0 0
    %219 = vmatmul.mubr.bf16.gmra.mrb[0].mxu0 %v116
    %v220 = vpop.f32.mrb[0].mxu0
    %v221 = vadd.f32 0.0, %v220
    %v222 = vpop.f32.mrb[0].mxu0
    %v223 = vpop.f32.mrb[0].mxu0
    %v224 = vadd.f32 0.0, %v223
    %v225 = vpop.f32.mrb[0].mxu0
    %226 = vmatprep.mubr.bf16.mxu0 0
    %227 = vmatmul.mubr.bf16.gmra.mrb[0].mxu0 %v117
    %v228 = vpop.f32.mrb[0].mxu0
    %v229 = vadd.f32 0.0, %v228
    %v230 = vpop.f32.mrb[0].mxu0
    %v231 = vpop.f32.mrb[0].mxu0
    %v232 = vadd.f32 0.0, %v231
    %v233 = vpop.f32.mrb[0].mxu0
    %234 = vdwg.mxu0
    %vm235 = vcmask 7168
    %v236 = vsel %vm235, %v205, -inf
    %v237 = vsel %vm235, %v208, -inf
    %v238 = vsel %vm235, %v213, -inf
    %v239 = vsel %vm235, %v216, -inf
    %v240 = vsel %vm235, %v221, -inf
    %v241 = vmax.f32 %v236, %v240
    %v242 = vsel %vm235, %v224, -inf
    %v243 = vmax.f32 %v237, %v242
    %v244 = vsel %vm235, %v229, -inf
    %v245 = vmax.f32 %v238, %v244
    %v246 = vsel %vm235, %v232, -inf
    %v247 = vmax.f32 %v239, %v246
    %v248 = vmax.f32 %v241, %v243
    %v249 = vmax.f32 %v245, %v247
    %v250 = vmax.f32 %v248, %v249
    %v251 = vrot.slane %v250, 4
    %v252 = vmax.f32 %v250, %v251
    %v253 = vrot.slane %v252, 2
    %v254 = vmax.f32 %v252, %v253
    %v255 = vrot.slane %v254, 1
    %v256 = vmax.f32 %v254, %v255
    %258 = vset.pattern.permute.xlu0 0
    %259 = vperm.xlu0 %258, %v256
    %v260 = vpop.permute.xlu0 %259
    %v262 = vsub.f32 %v205, %v260
    %v263 = vsub.f32 %v208, %v260
    %v264 = vsub.f32 %v213, %v260
    %v265 = vsub.f32 %v216, %v260
    %v266 = vsub.f32 %v221, %v260
    %v267 = vsub.f32 %v224, %v260
    %v268 = vsub.f32 %v229, %v260
    %v269 = vsub.f32 %v232, %v260
    %v270 = vmul.f32 %v262, 1.442695
    %v271 = vpow.pop %v270
    %v272 = vmul.f32 %v263, 1.442695
    %v273 = vpow.pop %v272
    %v274 = vmul.f32 %v264, 1.442695
    %v275 = vpow.pop %v274
    %v276 = vmul.f32 %v265, 1.442695
    %v277 = vpow.pop %v276
    %v278 = vmul.f32 %v266, 1.442695
    %v279 = vpow.pop %v278
    %v280 = vmul.f32 %v267, 1.442695
    %v281 = vpow.pop %v280
    %v282 = vmul.f32 %v268, 1.442695
    %v283 = vpow.pop %v282
    %v284 = vmul.f32 %v269, 1.442695
    %v285 = vpow.pop %v284
    %v286 = vlaneseq
    %v287 = vand.u32 %v286, 127
    %v288 = vld [vmem:[#allocation7] sm:$0xff]
    %v289 = vld [vmem:[#allocation7 + $0x8] sm:$0xff]
    %290 = vset.pattern.permute.xlu0 0
    %291 = vperm.xlu0 %290, %v288
    %v292 = vpop.permute.xlu0 %291
    %293 = vset.pattern.permute.xlu0 0
    %294 = vperm.xlu0 %293, %v289
    %v295 = vpop.permute.xlu0 %294
    %vm296 = vcmp.ge.s32.totalorder %v287, %v292
    %vm297 = vcmp.ge.s32.totalorder %v287, %v295
    %v298 = vld [vmem:[#allocation8] sm:$0xff]
    %v299 = vld [vmem:[#allocation8 + $0x8] sm:$0xff]
    %300 = vset.pattern.permute.xlu0 0
    %301 = vperm.xlu0 %300, %v298
    %v302 = vpop.permute.xlu0 %301
    %303 = vset.pattern.permute.xlu0 0
    %304 = vperm.xlu0 %303, %v299
    %v305 = vpop.permute.xlu0 %304
    %vm306 = vcmp.lt.s32.totalorder %v287, %v302
    %vm307 = vcmp.lt.s32.totalorder %v287, %v305
    %vm308 = vmand %vm296, %vm306
    %vm309 = vmand %vm297, %vm307
    %318 = vset.pattern.permute.xlu0 0
    %319 = vperm.xlu0 %318, %v271
    %v320 = vpop.permute.xlu0 %319
    %321 = vset.pattern.permute.xlu0 0
    %322 = vperm.xlu0 %321, %v273
    %v323 = vpop.permute.xlu0 %322
    %324 = vset.pattern.permute.xlu0 0
    %325 = vperm.xlu0 %324, %v275
    %v326 = vpop.permute.xlu0 %325
    %327 = vset.pattern.permute.xlu0 0
    %328 = vperm.xlu0 %327, %v277
    %v329 = vpop.permute.xlu0 %328
    %330 = vset.pattern.permute.xlu0 0
    %331 = vperm.xlu0 %330, %v279
    %v332 = vpop.permute.xlu0 %331
    %333 = vset.pattern.permute.xlu0 0
    %334 = vperm.xlu0 %333, %v281
    %v335 = vpop.permute.xlu0 %334
    %336 = vset.pattern.permute.xlu0 0
    %337 = vperm.xlu0 %336, %v283
    %v338 = vpop.permute.xlu0 %337
    %339 = vset.pattern.permute.xlu0 0
    %340 = vperm.xlu0 %339, %v285
    %v341 = vpop.permute.xlu0 %340
    %v342 = vlaneseq
    %v343 = vshrl.u32 %v342, 7
    %v344 = vsub.s32 %v287, %v343
    %v345 = vrot.slane %v320, %v344
    %v346 = vadd.s32 %v287, 4294967288
    %v347 = vlaneseq
    %v348 = vshrl.u32 %v347, 7
    %v349 = vsub.s32 %v346, %v348
    %v350 = vrot.slane %v323, %v349
    %vm351 = vcmask 130112
    %v352 = vsel %vm351, %v350, %v345
    %v353 = vadd.s32 %v287, 4294967280
    %v354 = vlaneseq
    %v355 = vshrl.u32 %v354, 7
    %v356 = vsub.s32 %v353, %v355
    %v357 = vrot.slane %v326, %v356
    %vm358 = vcmask 195712
    %v359 = vsel %vm358, %v357, %v352
    %v360 = vadd.s32 %v287, 4294967272
    %v361 = vlaneseq
    %v362 = vshrl.u32 %v361, 7
    %v363 = vsub.s32 %v360, %v362
    %v364 = vrot.slane %v329, %v363
    %vm365 = vcmask 261312
    %v366 = vsel %vm365, %v364, %v359
    %v367 = vadd.s32 %v287, 4294967264
    %v368 = vlaneseq
    %v369 = vshrl.u32 %v368, 7
    %v370 = vsub.s32 %v367, %v369
    %v371 = vrot.slane %v332, %v370
    %vm372 = vcmask 326912
    %v373 = vsel %vm372, %v371, %v366
    %v374 = vadd.s32 %v287, 4294967256
    %v375 = vlaneseq
    %v376 = vshrl.u32 %v375, 7
    %v377 = vsub.s32 %v374, %v376
    %v378 = vrot.slane %v335, %v377
    %vm379 = vcmask 392512
    %v380 = vsel %vm379, %v378, %v373
    %v381 = vadd.s32 %v287, 4294967248
    %v382 = vlaneseq
    %v383 = vshrl.u32 %v382, 7
    %v384 = vsub.s32 %v381, %v383
    %v385 = vrot.slane %v338, %v384
    %vm386 = vcmask 458112
    %v387 = vsel %vm386, %v385, %v380
    %v388 = vadd.s32 %v287, 4294967240
    %v389 = vlaneseq
    %v390 = vshrl.u32 %v389, 7
    %v391 = vsub.s32 %v388, %v390
    %v392 = vrot.slane %v341, %v391
    %vm393 = vcmask 523712
    %v394 = vsel %vm393, %v392, %v387
    %vm395 = vcmask 1042434
    %v396 = vsel %vm395, %v394, %v394
    %vm397 = vcmask 1043459
    %v398 = vsel %vm397, %v394, %v396
    %vm399 = vcmask 1044484
    %v400 = vsel %vm399, %v394, %v398
    %vm401 = vcmask 1045509
    %v402 = vsel %vm401, %v394, %v400
    %vm403 = vcmask 1046534
    %v404 = vsel %vm403, %v394, %v402
    %vm405 = vcmask 1047559
    %v406 = vsel %vm405, %v394, %v404
    %v408 = vsel %vm308, %v406, 0.0
    %v409 = vsel %vm309, %v406, 0.0
    %vm410 = vcmask 523264
    %v411 = vsel %vm410, %v408, 0.0
    %412 = vadd.xlane.f32.xlu0 %v411
    %v413 = vpop.xlane.xlu0 %412
    %v414 = vsel %vm410, %v409, 0.0
    %415 = vadd.xlane.f32.xlu0 %v414
    %v416 = vpop.xlane.xlu0 %415
    %v417 = vpack.c.bf16 %v409, %v408
    %v419 = vsel %vm410, %v417, 0
    %421 = vmatprep.subr.bf16.mxu0 0
    %422 = vmatpush1.bf16.msra.mxu0 %v114
    %423 = vmatprep.subr.bf16.mxu0 0
    %424 = vmatpush1.bf16.msra.mxu0 %v115
    %425 = vmatprep.subr.bf16.mxu0 0
    %426 = vmatpush1.bf16.msra.mxu0 %v116
    %427 = vmatprep.subr.bf16.mxu0 0
    %428 = vmatpush1.bf16.msra.mxu0 %v117
    %429 = vmatprep.subr.bf16.mxu0 0
    %430 = vmatpush1.bf16.msra.mxu0 0
    %431 = vmatprep.subr.bf16.mxu0 0
    %432 = vmatpush1.bf16.msra.mxu0 0
    %433 = vmatprep.subr.bf16.mxu0 0
    %434 = vmatpush1.bf16.msra.mxu0 0
    %435 = vmatprep.subr.bf16.mxu0 0
    %436 = vmatpush1.bf16.msra.mxu0 0
    %437 = vmatprep.subr.bf16.mxu0 0
    %438 = vmatpush1.bf16.msra.mxu0 0
    %439 = vmatprep.subr.bf16.mxu0 0
    %440 = vmatpush1.bf16.msra.mxu0 0
    %441 = vmatprep.subr.bf16.mxu0 0
    %442 = vmatpush1.bf16.msra.mxu0 0
    %443 = vmatprep.subr.bf16.mxu0 0
    %444 = vmatpush1.bf16.msra.mxu0 0
    %445 = vmatprep.subr.bf16.mxu0 0
    %446 = vmatpush1.bf16.msra.mxu0 0
    %447 = vmatprep.subr.bf16.mxu0 0
    %448 = vmatpush1.bf16.msra.mxu0 0
    %449 = vmatprep.subr.bf16.mxu0 0
    %450 = vmatpush1.bf16.msra.mxu0 0
    %451 = vmatprep.subr.bf16.mxu0 0
    %452 = vmatpush1.bf16.msra.mxu0 0
    %453 = vmatprep.mubr.bf16.mxu0 0
    %454 = vmatmul.mubr.bf16.gmra.mrb[0].mxu0 %v419
    %v455 = vpop.f32.mrb[0].mxu0
    %v456 = vadd.f32 0.0, %v455
    %v457 = vpop.f32.mrb[0].mxu0
    %v458 = vpop.f32.mrb[0].mxu0
    %v459 = vadd.f32 0.0, %v458
    %v460 = vpop.f32.mrb[0].mxu0
    %461 = vdwg.mxu0
    %v462 = vrcp.pop %v413
    %v463 = vrcp.pop %v416
    %v464 = vmul.f32 %v456, %v462
    %v465 = vmul.f32 %v459, %v463
    %466 = vst [vmem:[#allocation10] sm:$0xff] %v464
    %467 = vst [vmem:[#allocation10 + $0x8] sm:$0xff] %v465
    // Predicated region
    $region34: #{tpu_custom_call.1} parent=1 // pred_check
      _
    $region35: #{tpu_custom_call.1} parent=1 // pred_check_branch
      %469 = sbr.rel (0) target = $region37
    $region36: #{tpu_custom_call.1} parent=1 // pred_region
      %s471 = ssub.s32 256, 256
      %472 = vsyncadd [#allocation4], %s471
      %s473 = sshll.u32 [#allocation10], 4
      %s474 = int_to_ptr.vmem [resolvable:$true] %s473
      %479 = dma.vmem_to_hbm [thread:$0]  %s474, 256, %s4, [#allocation4], 128, 128, 8
    $region37: #{tpu_custom_call.1} parent=1 // pred_fallthru
      _
    // Predicated region
    $region38: #{tpu_custom_call.1} parent=1 // pred_check
      _
    $region39: #{tpu_custom_call.1} parent=1 // pred_check_branch
      %481 = sbr.rel (0) target = $region41
    $region40: #{tpu_custom_call.1} parent=1 // pred_region
      %482 = dma.done [#allocation4], 256
    $region41: #{tpu_custom_call.1} parent=1 // pred_fallthru
      _
    %483 = vsyncpa [#allocation3], 1
    %484 = vsyncpa [#allocation6], 1
    %485 = vsyncpa [#allocation9], 1
    %486 = vsyncpa [#allocation4], 1

</llo_original>
